<compile_context>
chip_gen: v5e
topology: v5e:2x2
jax: 0.10.0
libtpu: 0.0.40
codegen_flags: <defaults>
</compile_context>

<pallas_src>
import functools

import jax
import jax.numpy as jnp
import numpy as np
from jax.experimental import pallas as pl
from jax.experimental.pallas import tpu as pltpu


def _round_up(v, m):
    return ((v + m - 1) // m) * m


# ---------------------------------------------------------------------------
# Fused bottleneck kernel: one grid step == one image (all stages in VMEM)
# ---------------------------------------------------------------------------
def _bottleneck_kernel(x_ref, w1_ref, b1_ref, w2_ref, b2_ref, w3_ref, b3_ref,
                       out_ref, h1pad_ref, *, H, W, lane_pad, compute_dtype):
    HW = H * W
    K = lane_pad                      # zero-pad width (>= W+1, lane aligned)

    x = x_ref[0]                      # (Cp, HW) f32 — also the residual

    # ---- stage 1: 1x1 conv (BN1 scale folded into w1) + shift + ReLU -------
    h1 = jnp.dot(w1_ref[...], x.astype(compute_dtype),
                 preferred_element_type=jnp.float32)
    h1 = jnp.maximum(h1 + b1_ref[...], 0.0)          # (Cmp, HW) f32

    # ---- stage 2: 3x3 conv (padding=1) as 9 shifted matmuls ----------------
    # Zero-padded copy of h1 along the flattened spatial (lane) axis; the pad
    # of width K >= W+1 makes every vertical out-of-image tap read exact zeros.
    h1pad_ref[...] = jnp.zeros(h1pad_ref.shape, h1pad_ref.dtype)
    h1pad_ref[:, K:K + HW] = h1.astype(compute_dtype)

    # Column index of every flattened spatial position (for horizontal edges).
    col = jax.lax.broadcasted_iota(jnp.int32, (1, HW), 1) % W

    acc2 = jnp.zeros(h1.shape, jnp.float32)
    for kh in range(3):
        for kw in range(3):
            dh, dw = kh - 1, kw - 1
            d = dh * W + dw
            # tap[:, p] == h1 at spatial position (h+dh, w+dw), zeros outside.
            tap = h1pad_ref[:, K + d:K + d + HW]      # (Cmp, HW) compute_dtype
            if dw != 0:
                valid = (col + dw >= 0) & (col + dw < W)
                tap = jnp.where(valid, tap, jnp.zeros_like(tap))
            acc2 = acc2 + jnp.dot(w2_ref[3 * kh + kw], tap,
                                  preferred_element_type=jnp.float32)
    h2 = jnp.maximum(acc2 + b2_ref[...], 0.0)         # (Cmp, HW) f32

    # ---- stage 3: 1x1 conv (BN3 scale folded) + shift + residual add -------
    h3 = jnp.dot(w3_ref[...], h2.astype(compute_dtype),
                 preferred_element_type=jnp.float32)
    out_ref[0] = (h3 + b3_ref[...] + x).astype(out_ref.dtype)


# ---------------------------------------------------------------------------
# Parameter setup / BN folding
# ---------------------------------------------------------------------------
def _bn_fold(gamma, beta, mean, var, eps=1e-5):
    scale = gamma / jnp.sqrt(var + eps)
    shift = beta - mean * scale
    return scale, shift


def init_params(key, in_out_channel, mid_channel):
    ks = jax.random.split(key, 9)
    p = {}
    # Conv weights in PyTorch layout (Cout, Cin, kh, kw).
    p["w1"] = jax.random.normal(ks[0], (mid_channel, in_out_channel, 1, 1), jnp.float32) * 0.1
    p["w2"] = jax.random.normal(ks[1], (mid_channel, mid_channel, 3, 3), jnp.float32) * 0.1
    p["w3"] = jax.random.normal(ks[2], (in_out_channel, mid_channel, 1, 1), jnp.float32) * 0.1
    # BatchNorm params (affine + running stats), inference mode.
    for i, c in zip((1, 2, 3), (mid_channel, mid_channel, in_out_channel)):
        p[f"bn{i}_gamma"] = 1.0 + 0.05 * jax.random.normal(ks[2 + i], (c,), jnp.float32)
        p[f"bn{i}_beta"] = 0.05 * jax.random.normal(ks[5 + i], (c,), jnp.float32)
        p[f"bn{i}_mean"] = jnp.linspace(-0.1, 0.1, c).astype(jnp.float32)
        p[f"bn{i}_var"] = jnp.linspace(0.9, 1.1, c).astype(jnp.float32)
    return p


# ---------------------------------------------------------------------------
# Forward wrapper (input / output NCHW, matching the PyTorch module)
# ---------------------------------------------------------------------------
def res_bottleneck_forward(params, x_nchw, *, compute_dtype=jnp.bfloat16):
    N, C, H, W = x_nchw.shape
    HW = H * W
    Cmid = params["w1"].shape[0]

    # Sublane-aligned channel counts; padded channels stay exactly zero.
    Cp = _round_up(C, 8)
    Cmp = _round_up(Cmid, 8)
    # Lane-aligned zero-pad width for the in-kernel padded h1 scratch.
    K = _round_up(W + 1, 128)

    s1, b1 = _bn_fold(params["bn1_gamma"], params["bn1_beta"],
                      params["bn1_mean"], params["bn1_var"])
    s2, b2 = _bn_fold(params["bn2_gamma"], params["bn2_beta"],
                      params["bn2_mean"], params["bn2_var"])
    s3, b3 = _bn_fold(params["bn3_gamma"], params["bn3_beta"],
                      params["bn3_mean"], params["bn3_var"])

    # Fold the BN scales into the conv weights (per output channel).
    w1 = params["w1"][:, :, 0, 0] * s1[:, None]                   # (Cmid, C)
    w2 = params["w2"] * s2[:, None, None, None]                   # (Cmid, Cmid, 3, 3)
    w2 = jnp.transpose(w2, (2, 3, 0, 1)).reshape(9, Cmid, Cmid)   # tap kh*3+kw -> (Cout, Cin)
    w3 = params["w3"][:, :, 0, 0] * s3[:, None]                   # (C, Cmid)

    # Pad channel dims to multiples of 8 and cast weights to the compute dtype.
    w1p = jnp.zeros((Cmp, Cp), compute_dtype).at[:Cmid, :C].set(w1.astype(compute_dtype))
    w2p = jnp.zeros((9, Cmp, Cmp), compute_dtype).at[:, :Cmid, :Cmid].set(w2.astype(compute_dtype))
    w3p = jnp.zeros((Cp, Cmp), compute_dtype).at[:C, :Cmid].set(w3.astype(compute_dtype))
    b1p = jnp.zeros((Cmp, 1), jnp.float32).at[:Cmid, 0].set(b1)
    b2p = jnp.zeros((Cmp, 1), jnp.float32).at[:Cmid, 0].set(b2)
    b3p = jnp.zeros((Cp, 1), jnp.float32).at[:C, 0].set(b3)

    # NCHW-native: just collapse the spatial dims (free reshape), no transpose.
    x3 = x_nchw.reshape(N, C, HW).astype(jnp.float32)
    if Cp != C:
        x3 = jnp.pad(x3, ((0, 0), (0, Cp - C), (0, 0)))

    itemsize = jnp.dtype(compute_dtype).itemsize
    flops = 2 * N * HW * (Cmp * Cp + 9 * Cmp * Cmp + Cp * Cmp)
    bytes_accessed = ((x3.size + N * Cp * HW) * 4
                      + (w1p.size + w2p.size + w3p.size) * itemsize
                      + (b1p.size + b2p.size + b3p.size) * 4)

    kernel = functools.partial(_bottleneck_kernel, H=H, W=W, lane_pad=K,
                               compute_dtype=compute_dtype)

    out = pl.pallas_call(
        kernel,
        out_shape=jax.ShapeDtypeStruct((N, Cp, HW), jnp.float32),
        grid=(N,),
        in_specs=[
            pl.BlockSpec((1, Cp, HW), lambda n: (n, 0, 0)),      # x (also residual)
            pl.BlockSpec((Cmp, Cp), lambda n: (0, 0)),           # w1 (BN1 folded)
            pl.BlockSpec((Cmp, 1), lambda n: (0, 0)),            # bn1 shift
            pl.BlockSpec((9, Cmp, Cmp), lambda n: (0, 0, 0)),    # w2 taps (BN2 folded)
            pl.BlockSpec((Cmp, 1), lambda n: (0, 0)),            # bn2 shift
            pl.BlockSpec((Cp, Cmp), lambda n: (0, 0)),           # w3 (BN3 folded)
            pl.BlockSpec((Cp, 1), lambda n: (0, 0)),             # bn3 shift
        ],
        out_specs=pl.BlockSpec((1, Cp, HW), lambda n: (n, 0, 0)),
        scratch_shapes=[pltpu.VMEM((Cmp, HW + 2 * K), compute_dtype)],
        compiler_params=pltpu.CompilerParams(
            dimension_semantics=("parallel",),       # batch axis across TCs (v7x)
            vmem_limit_bytes=32 * 1024 * 1024,
        ),
        cost_estimate=pl.CostEstimate(
            flops=int(flops), transcendentals=0,
            bytes_accessed=int(bytes_accessed)),
    )(x3, w1p, b1p, w2p, b2p, w3p, b3p)

    return out[:, :C, :].reshape(N, C, H, W)


# ---------------------------------------------------------------------------
# Pure-JAX reference (eval-mode BatchNorm), for correctness checks
# ---------------------------------------------------------------------------
def _ref_forward(params, x_nchw):
    def conv(x, w, pad):
        return jax.lax.conv_general_dilated(
            x, w, window_strides=(1, 1), padding=pad,
            dimension_numbers=("NCHW", "OIHW", "NCHW"))

    def bn(x, i):
        s, b = _bn_fold(params[f"bn{i}_gamma"], params[f"bn{i}_beta"],
                        params[f"bn{i}_mean"], params[f"bn{i}_var"])
        return x * s[None, :, None, None] + b[None, :, None, None]

    identity = x_nchw
    h = jax.nn.relu(bn(conv(x_nchw, params["w1"], "VALID"), 1))
    h = jax.nn.relu(bn(conv(h, params["w2"], [(1, 1), (1, 1)]), 2))
    h = bn(conv(h, params["w3"], "VALID"), 3)
    return h + identity


if __name__ == "__main__":
    key = jax.random.PRNGKey(0)
    kp, kx = jax.random.split(key)

    in_out_channel, mid_channel = 8, 4
    N, H, W = 2, 16, 16
    params = init_params(kp, in_out_channel, mid_channel)
    x = jax.random.normal(kx, (N, in_out_channel, H, W), jnp.float32)

    ref = jax.block_until_ready(_ref_forward(params, x))

    # f32 compute path: tight check of the fused-kernel structure.
    fwd_f32 = jax.jit(functools.partial(res_bottleneck_forward,
                                        compute_dtype=jnp.float32))
    out_f32 = jax.block_until_ready(fwd_f32(params, x))
    np.testing.assert_allclose(np.asarray(out_f32), np.asarray(ref),
                               rtol=1e-4, atol=1e-4)

    # bf16 compute path (default): halves HBM weight traffic / 2x MXU rate,
    # f32 accumulation + f32 epilogue + f32 residual.
    fwd_bf16 = jax.jit(res_bottleneck_forward)
    out = jax.block_until_ready(fwd_bf16(params, x))
    np.testing.assert_allclose(np.asarray(out), np.asarray(ref),
                               rtol=2e-2, atol=2e-2)

    assert out.shape == x.shape and out.dtype == jnp.float32
    print("KERNEL_OK")
</pallas_src>

<mosaic_0001>
module attributes {stable_mosaic.version = 11 : i64} {
  func.func @_bottleneck_kernel(%arg0: i32, %arg1: memref<1x8x256xf32, #tpu.memory_space<vmem>>, %arg2: memref<8x8xf32, #tpu.memory_space<vmem>>, %arg3: memref<8x1xf32, #tpu.memory_space<vmem>>, %arg4: memref<9x8x8xf32, #tpu.memory_space<vmem>>, %arg5: memref<8x1xf32, #tpu.memory_space<vmem>>, %arg6: memref<8x8xf32, #tpu.memory_space<vmem>>, %arg7: memref<8x1xf32, #tpu.memory_space<vmem>>, %arg8: memref<1x8x256xf32, #tpu.memory_space<vmem>>, %arg9: memref<8x512xf32, #tpu.memory_space<vmem>>) attributes {dimension_semantics = [#tpu.dimension_semantics<parallel>], iteration_bounds = array<i64: 2>, scalar_prefetch = 0 : i64, scratch_operands = 1 : i64, tpu.core_type = #tpu.core_type<tc>, window_params = [{transform_indices = @transform_0, window_bounds = array<i64: 1, 8, 256>}, {pipeline_mode = #tpu.pipeline_mode<synchronous>, transform_indices = @transform_1, window_bounds = array<i64: 8, 8>}, {pipeline_mode = #tpu.pipeline_mode<synchronous>, transform_indices = @transform_2, window_bounds = array<i64: 8, 1>}, {pipeline_mode = #tpu.pipeline_mode<synchronous>, transform_indices = @transform_3, window_bounds = array<i64: 9, 8, 8>}, {pipeline_mode = #tpu.pipeline_mode<synchronous>, transform_indices = @transform_4, window_bounds = array<i64: 8, 1>}, {pipeline_mode = #tpu.pipeline_mode<synchronous>, transform_indices = @transform_5, window_bounds = array<i64: 8, 8>}, {pipeline_mode = #tpu.pipeline_mode<synchronous>, transform_indices = @transform_6, window_bounds = array<i64: 8, 1>}, {transform_indices = @transform_7, window_bounds = array<i64: 1, 8, 256>}]} {
    %c0 = arith.constant 0 : index
    %c0_0 = arith.constant 0 : index
    %c0_1 = arith.constant 0 : index
    %0 = vector.load %arg1[%c0, %c0_0, %c0_1] : memref<1x8x256xf32, #tpu.memory_space<vmem>>, vector<1x8x256xf32>
    %1 = vector.shape_cast %0 : vector<1x8x256xf32> to vector<8x256xf32>
    %c0_2 = arith.constant 0 : index
    %c0_3 = arith.constant 0 : index
    %2 = vector.load %arg2[%c0_2, %c0_3] : memref<8x8xf32, #tpu.memory_space<vmem>>, vector<8x8xf32>
    %cst = arith.constant dense<0.000000e+00> : vector<8x256xf32>
    %3 = tpu.matmul %2, %1, %cst {dimension_numbers = #tpu.dot_dimension_numbers<[1], [0], [0], [1], [0, 0, 1, 1], [], []>} : vector<8x8xf32>, vector<8x256xf32>, vector<8x256xf32> -> vector<8x256xf32>
    %c0_4 = arith.constant 0 : index
    %c0_5 = arith.constant 0 : index
    %4 = vector.load %arg3[%c0_4, %c0_5] : memref<8x1xf32, #tpu.memory_space<vmem>>, vector<8x1xf32>
    %5 = vector.broadcast %4 : vector<8x1xf32> to vector<8x256xf32>
    %6 = arith.addf %3, %5 : vector<8x256xf32>
    %cst_6 = arith.constant 0.000000e+00 : f32
    %7 = vector.broadcast %cst_6 : f32 to vector<8x256xf32>
    %8 = arith.maximumf %6, %7 : vector<8x256xf32>
    %cst_7 = arith.constant 0.000000e+00 : f32
    %9 = vector.broadcast %cst_7 : f32 to vector<8x512xf32>
    %c0_8 = arith.constant 0 : index
    %c0_9 = arith.constant 0 : index
    %10 = vector.load %arg9[%c0_8, %c0_9] : memref<8x512xf32, #tpu.memory_space<vmem>>, vector<8x512xf32>
    tpu.vector_store %arg9[%c0_8, %c0_9], %9 {strides = array<i32>} : memref<8x512xf32, #tpu.memory_space<vmem>>, vector<8x512xf32>,
    %c0_10 = arith.constant 0 : index
    %c128 = arith.constant 128 : index
    %11 = vector.load %arg9[%c0_10, %c128] : memref<8x512xf32, #tpu.memory_space<vmem>>, vector<8x256xf32>
    tpu.vector_store %arg9[%c0_10, %c128], %8 {strides = array<i32>} : memref<8x512xf32, #tpu.memory_space<vmem>>, vector<8x256xf32>,
    %12 = tpu.iota {dimensions = array<i32: 1>} : vector<1x256xi32>
    %c16_i32 = arith.constant 16 : i32
    %c0_i32 = arith.constant 0 : i32
    %13 = arith.cmpi eq, %c16_i32, %c0_i32 : i32
    %c1_i32 = arith.constant 1 : i32
    %14 = arith.select %13, %c1_i32, %c16_i32 : i32
    %15 = vector.broadcast %14 : i32 to vector<1x256xi32>
    %16 = arith.remsi %12, %15 : vector<1x256xi32>
    %c0_i32_11 = arith.constant 0 : i32
    %17 = vector.broadcast %c0_i32_11 : i32 to vector<1x256xi32>
    %18 = arith.cmpi ne, %16, %17 : vector<1x256xi32>
    %c0_i32_12 = arith.constant 0 : i32
    %19 = vector.broadcast %c0_i32_12 : i32 to vector<1x256xi32>
    %20 = arith.cmpi slt, %16, %19 : vector<1x256xi32>
    %c0_i32_13 = arith.constant 0 : i32
    %21 = arith.cmpi slt, %14, %c0_i32_13 : i32
    %22 = vector.broadcast %21 : i1 to vector<1x256xi1>
    %23 = vector.broadcast %22 : vector<1x256xi1> to vector<1x256xi1>
    %24 = arith.xori %20, %23 : vector<1x256xi1>
    %25 = arith.andi %24, %18 : vector<1x256xi1>
    %26 = vector.broadcast %14 : i32 to vector<1x256xi32>
    %27 = arith.addi %16, %26 : vector<1x256xi32>
    %28 = arith.select %25, %27, %16 : vector<1x256xi1>, vector<1x256xi32>
    %cst_14 = arith.constant 0.000000e+00 : f32
    %29 = vector.broadcast %cst_14 : f32 to vector<8x256xf32>
    %c0_15 = arith.constant 0 : index
    %c111 = arith.constant 111 : index
    %30 = vector.load %arg9[%c0_15, %c111] : memref<8x512xf32, #tpu.memory_space<vmem>>, vector<8x256xf32>
    %c-1_i32 = arith.constant -1 : i32
    %31 = vector.broadcast %c-1_i32 : i32 to vector<1x256xi32>
    %32 = arith.addi %28, %31 : vector<1x256xi32>
    %c0_i32_16 = arith.constant 0 : i32
    %33 = vector.broadcast %c0_i32_16 : i32 to vector<1x256xi32>
    %34 = arith.cmpi sge, %32, %33 : vector<1x256xi32>
    %c-1_i32_17 = arith.constant -1 : i32
    %35 = vector.broadcast %c-1_i32_17 : i32 to vector<1x256xi32>
    %36 = arith.addi %28, %35 : vector<1x256xi32>
    %c16_i32_18 = arith.constant 16 : i32
    %37 = vector.broadcast %c16_i32_18 : i32 to vector<1x256xi32>
    %38 = arith.cmpi slt, %36, %37 : vector<1x256xi32>
    %39 = arith.andi %34, %38 : vector<1x256xi1>
    %cst_19 = arith.constant 0.000000e+00 : f32
    %40 = vector.broadcast %cst_19 : f32 to vector<8x256xf32>
    %41 = vector.shape_cast %39 : vector<1x256xi1> to vector<1x256xi1>
    %42 = vector.broadcast %41 : vector<1x256xi1> to vector<8x256xi1>
    %43 = arith.select %42, %30, %40 : vector<8x256xi1>, vector<8x256xf32>
    %c0_20 = arith.constant 0 : index
    %c0_21 = arith.constant 0 : index
    %c0_22 = arith.constant 0 : index
    %44 = vector.load %arg4[%c0_20, %c0_21, %c0_22] : memref<9x8x8xf32, #tpu.memory_space<vmem>>, vector<1x8x8xf32>
    %45 = vector.shape_cast %44 : vector<1x8x8xf32> to vector<8x8xf32>
    %cst_23 = arith.constant dense<0.000000e+00> : vector<8x256xf32>
    %46 = tpu.matmul %45, %43, %cst_23 {dimension_numbers = #tpu.dot_dimension_numbers<[1], [0], [0], [1], [0, 0, 1, 1], [], []>} : vector<8x8xf32>, vector<8x256xf32>, vector<8x256xf32> -> vector<8x256xf32>
    %47 = arith.addf %29, %46 : vector<8x256xf32>
    %c0_24 = arith.constant 0 : index
    %c112 = arith.constant 112 : index
    %48 = vector.load %arg9[%c0_24, %c112] : memref<8x512xf32, #tpu.memory_space<vmem>>, vector<8x256xf32>
    %c1 = arith.constant 1 : index
    %c0_25 = arith.constant 0 : index
    %c0_26 = arith.constant 0 : index
    %49 = vector.load %arg4[%c1, %c0_25, %c0_26] : memref<9x8x8xf32, #tpu.memory_space<vmem>>, vector<1x8x8xf32>
    %50 = vector.shape_cast %49 : vector<1x8x8xf32> to vector<8x8xf32>
    %cst_27 = arith.constant dense<0.000000e+00> : vector<8x256xf32>
    %51 = tpu.matmul %50, %48, %cst_27 {dimension_numbers = #tpu.dot_dimension_numbers<[1], [0], [0], [1], [0, 0, 1, 1], [], []>} : vector<8x8xf32>, vector<8x256xf32>, vector<8x256xf32> -> vector<8x256xf32>
    %52 = arith.addf %47, %51 : vector<8x256xf32>
    %c0_28 = arith.constant 0 : index
    %c113 = arith.constant 113 : index
    %53 = vector.load %arg9[%c0_28, %c113] : memref<8x512xf32, #tpu.memory_space<vmem>>, vector<8x256xf32>
    %c1_i32_29 = arith.constant 1 : i32
    %54 = vector.broadcast %c1_i32_29 : i32 to vector<1x256xi32>
    %55 = arith.addi %28, %54 : vector<1x256xi32>
    %c0_i32_30 = arith.constant 0 : i32
    %56 = vector.broadcast %c0_i32_30 : i32 to vector<1x256xi32>
    %57 = arith.cmpi sge, %55, %56 : vector<1x256xi32>
    %c1_i32_31 = arith.constant 1 : i32
    %58 = vector.broadcast %c1_i32_31 : i32 to vector<1x256xi32>
    %59 = arith.addi %28, %58 : vector<1x256xi32>
    %c16_i32_32 = arith.constant 16 : i32
    %60 = vector.broadcast %c16_i32_32 : i32 to vector<1x256xi32>
    %61 = arith.cmpi slt, %59, %60 : vector<1x256xi32>
    %62 = arith.andi %57, %61 : vector<1x256xi1>
    %cst_33 = arith.constant 0.000000e+00 : f32
    %63 = vector.broadcast %cst_33 : f32 to vector<8x256xf32>
    %64 = vector.shape_cast %62 : vector<1x256xi1> to vector<1x256xi1>
    %65 = vector.broadcast %64 : vector<1x256xi1> to vector<8x256xi1>
    %66 = arith.select %65, %53, %63 : vector<8x256xi1>, vector<8x256xf32>
    %c2 = arith.constant 2 : index
    %c0_34 = arith.constant 0 : index
    %c0_35 = arith.constant 0 : index
    %67 = vector.load %arg4[%c2, %c0_34, %c0_35] : memref<9x8x8xf32, #tpu.memory_space<vmem>>, vector<1x8x8xf32>
    %68 = vector.shape_cast %67 : vector<1x8x8xf32> to vector<8x8xf32>
    %cst_36 = arith.constant dense<0.000000e+00> : vector<8x256xf32>
    %69 = tpu.matmul %68, %66, %cst_36 {dimension_numbers = #tpu.dot_dimension_numbers<[1], [0], [0], [1], [0, 0, 1, 1], [], []>} : vector<8x8xf32>, vector<8x256xf32>, vector<8x256xf32> -> vector<8x256xf32>
    %70 = arith.addf %52, %69 : vector<8x256xf32>
    %c0_37 = arith.constant 0 : index
    %c127 = arith.constant 127 : index
    %71 = vector.load %arg9[%c0_37, %c127] : memref<8x512xf32, #tpu.memory_space<vmem>>, vector<8x256xf32>
    %c-1_i32_38 = arith.constant -1 : i32
    %72 = vector.broadcast %c-1_i32_38 : i32 to vector<1x256xi32>
    %73 = arith.addi %28, %72 : vector<1x256xi32>
    %c0_i32_39 = arith.constant 0 : i32
    %74 = vector.broadcast %c0_i32_39 : i32 to vector<1x256xi32>
    %75 = arith.cmpi sge, %73, %74 : vector<1x256xi32>
    %c-1_i32_40 = arith.constant -1 : i32
    %76 = vector.broadcast %c-1_i32_40 : i32 to vector<1x256xi32>
    %77 = arith.addi %28, %76 : vector<1x256xi32>
    %c16_i32_41 = arith.constant 16 : i32
    %78 = vector.broadcast %c16_i32_41 : i32 to vector<1x256xi32>
    %79 = arith.cmpi slt, %77, %78 : vector<1x256xi32>
    %80 = arith.andi %75, %79 : vector<1x256xi1>
    %cst_42 = arith.constant 0.000000e+00 : f32
    %81 = vector.broadcast %cst_42 : f32 to vector<8x256xf32>
    %82 = vector.shape_cast %80 : vector<1x256xi1> to vector<1x256xi1>
    %83 = vector.broadcast %82 : vector<1x256xi1> to vector<8x256xi1>
    %84 = arith.select %83, %71, %81 : vector<8x256xi1>, vector<8x256xf32>
    %c3 = arith.constant 3 : index
    %c0_43 = arith.constant 0 : index
    %c0_44 = arith.constant 0 : index
    %85 = vector.load %arg4[%c3, %c0_43, %c0_44] : memref<9x8x8xf32, #tpu.memory_space<vmem>>, vector<1x8x8xf32>
    %86 = vector.shape_cast %85 : vector<1x8x8xf32> to vector<8x8xf32>
    %cst_45 = arith.constant dense<0.000000e+00> : vector<8x256xf32>
    %87 = tpu.matmul %86, %84, %cst_45 {dimension_numbers = #tpu.dot_dimension_numbers<[1], [0], [0], [1], [0, 0, 1, 1], [], []>} : vector<8x8xf32>, vector<8x256xf32>, vector<8x256xf32> -> vector<8x256xf32>
    %88 = arith.addf %70, %87 : vector<8x256xf32>
    %c0_46 = arith.constant 0 : index
    %c128_47 = arith.constant 128 : index
    %89 = vector.load %arg9[%c0_46, %c128_47] : memref<8x512xf32, #tpu.memory_space<vmem>>, vector<8x256xf32>
    %c4 = arith.constant 4 : index
    %c0_48 = arith.constant 0 : index
    %c0_49 = arith.constant 0 : index
    %90 = vector.load %arg4[%c4, %c0_48, %c0_49] : memref<9x8x8xf32, #tpu.memory_space<vmem>>, vector<1x8x8xf32>
    %91 = vector.shape_cast %90 : vector<1x8x8xf32> to vector<8x8xf32>
    %cst_50 = arith.constant dense<0.000000e+00> : vector<8x256xf32>
    %92 = tpu.matmul %91, %89, %cst_50 {dimension_numbers = #tpu.dot_dimension_numbers<[1], [0], [0], [1], [0, 0, 1, 1], [], []>} : vector<8x8xf32>, vector<8x256xf32>, vector<8x256xf32> -> vector<8x256xf32>
    %93 = arith.addf %88, %92 : vector<8x256xf32>
    %c0_51 = arith.constant 0 : index
    %c129 = arith.constant 129 : index
    %94 = vector.load %arg9[%c0_51, %c129] : memref<8x512xf32, #tpu.memory_space<vmem>>, vector<8x256xf32>
    %c1_i32_52 = arith.constant 1 : i32
    %95 = vector.broadcast %c1_i32_52 : i32 to vector<1x256xi32>
    %96 = arith.addi %28, %95 : vector<1x256xi32>
    %c0_i32_53 = arith.constant 0 : i32
    %97 = vector.broadcast %c0_i32_53 : i32 to vector<1x256xi32>
    %98 = arith.cmpi sge, %96, %97 : vector<1x256xi32>
    %c1_i32_54 = arith.constant 1 : i32
    %99 = vector.broadcast %c1_i32_54 : i32 to vector<1x256xi32>
    %100 = arith.addi %28, %99 : vector<1x256xi32>
    %c16_i32_55 = arith.constant 16 : i32
    %101 = vector.broadcast %c16_i32_55 : i32 to vector<1x256xi32>
    %102 = arith.cmpi slt, %100, %101 : vector<1x256xi32>
    %103 = arith.andi %98, %102 : vector<1x256xi1>
    %cst_56 = arith.constant 0.000000e+00 : f32
    %104 = vector.broadcast %cst_56 : f32 to vector<8x256xf32>
    %105 = vector.shape_cast %103 : vector<1x256xi1> to vector<1x256xi1>
    %106 = vector.broadcast %105 : vector<1x256xi1> to vector<8x256xi1>
    %107 = arith.select %106, %94, %104 : vector<8x256xi1>, vector<8x256xf32>
    %c5 = arith.constant 5 : index
    %c0_57 = arith.constant 0 : index
    %c0_58 = arith.constant 0 : index
    %108 = vector.load %arg4[%c5, %c0_57, %c0_58] : memref<9x8x8xf32, #tpu.memory_space<vmem>>, vector<1x8x8xf32>
    %109 = vector.shape_cast %108 : vector<1x8x8xf32> to vector<8x8xf32>
    %cst_59 = arith.constant dense<0.000000e+00> : vector<8x256xf32>
    %110 = tpu.matmul %109, %107, %cst_59 {dimension_numbers = #tpu.dot_dimension_numbers<[1], [0], [0], [1], [0, 0, 1, 1], [], []>} : vector<8x8xf32>, vector<8x256xf32>, vector<8x256xf32> -> vector<8x256xf32>
    %111 = arith.addf %93, %110 : vector<8x256xf32>
    %c0_60 = arith.constant 0 : index
    %c143 = arith.constant 143 : index
    %112 = vector.load %arg9[%c0_60, %c143] : memref<8x512xf32, #tpu.memory_space<vmem>>, vector<8x256xf32>
    %c-1_i32_61 = arith.constant -1 : i32
    %113 = vector.broadcast %c-1_i32_61 : i32 to vector<1x256xi32>
    %114 = arith.addi %28, %113 : vector<1x256xi32>
    %c0_i32_62 = arith.constant 0 : i32
    %115 = vector.broadcast %c0_i32_62 : i32 to vector<1x256xi32>
    %116 = arith.cmpi sge, %114, %115 : vector<1x256xi32>
    %c-1_i32_63 = arith.constant -1 : i32
    %117 = vector.broadcast %c-1_i32_63 : i32 to vector<1x256xi32>
    %118 = arith.addi %28, %117 : vector<1x256xi32>
    %c16_i32_64 = arith.constant 16 : i32
    %119 = vector.broadcast %c16_i32_64 : i32 to vector<1x256xi32>
    %120 = arith.cmpi slt, %118, %119 : vector<1x256xi32>
    %121 = arith.andi %116, %120 : vector<1x256xi1>
    %cst_65 = arith.constant 0.000000e+00 : f32
    %122 = vector.broadcast %cst_65 : f32 to vector<8x256xf32>
    %123 = vector.shape_cast %121 : vector<1x256xi1> to vector<1x256xi1>
    %124 = vector.broadcast %123 : vector<1x256xi1> to vector<8x256xi1>
    %125 = arith.select %124, %112, %122 : vector<8x256xi1>, vector<8x256xf32>
    %c6 = arith.constant 6 : index
    %c0_66 = arith.constant 0 : index
    %c0_67 = arith.constant 0 : index
    %126 = vector.load %arg4[%c6, %c0_66, %c0_67] : memref<9x8x8xf32, #tpu.memory_space<vmem>>, vector<1x8x8xf32>
    %127 = vector.shape_cast %126 : vector<1x8x8xf32> to vector<8x8xf32>
    %cst_68 = arith.constant dense<0.000000e+00> : vector<8x256xf32>
    %128 = tpu.matmul %127, %125, %cst_68 {dimension_numbers = #tpu.dot_dimension_numbers<[1], [0], [0], [1], [0, 0, 1, 1], [], []>} : vector<8x8xf32>, vector<8x256xf32>, vector<8x256xf32> -> vector<8x256xf32>
    %129 = arith.addf %111, %128 : vector<8x256xf32>
    %c0_69 = arith.constant 0 : index
    %c144 = arith.constant 144 : index
    %130 = vector.load %arg9[%c0_69, %c144] : memref<8x512xf32, #tpu.memory_space<vmem>>, vector<8x256xf32>
    %c7 = arith.constant 7 : index
    %c0_70 = arith.constant 0 : index
    %c0_71 = arith.constant 0 : index
    %131 = vector.load %arg4[%c7, %c0_70, %c0_71] : memref<9x8x8xf32, #tpu.memory_space<vmem>>, vector<1x8x8xf32>
    %132 = vector.shape_cast %131 : vector<1x8x8xf32> to vector<8x8xf32>
    %cst_72 = arith.constant dense<0.000000e+00> : vector<8x256xf32>
    %133 = tpu.matmul %132, %130, %cst_72 {dimension_numbers = #tpu.dot_dimension_numbers<[1], [0], [0], [1], [0, 0, 1, 1], [], []>} : vector<8x8xf32>, vector<8x256xf32>, vector<8x256xf32> -> vector<8x256xf32>
    %134 = arith.addf %129, %133 : vector<8x256xf32>
    %c0_73 = arith.constant 0 : index
    %c145 = arith.constant 145 : index
    %135 = vector.load %arg9[%c0_73, %c145] : memref<8x512xf32, #tpu.memory_space<vmem>>, vector<8x256xf32>
    %c1_i32_74 = arith.constant 1 : i32
    %136 = vector.broadcast %c1_i32_74 : i32 to vector<1x256xi32>
    %137 = arith.addi %28, %136 : vector<1x256xi32>
    %c0_i32_75 = arith.constant 0 : i32
    %138 = vector.broadcast %c0_i32_75 : i32 to vector<1x256xi32>
    %139 = arith.cmpi sge, %137, %138 : vector<1x256xi32>
    %c1_i32_76 = arith.constant 1 : i32
    %140 = vector.broadcast %c1_i32_76 : i32 to vector<1x256xi32>
    %141 = arith.addi %28, %140 : vector<1x256xi32>
    %c16_i32_77 = arith.constant 16 : i32
    %142 = vector.broadcast %c16_i32_77 : i32 to vector<1x256xi32>
    %143 = arith.cmpi slt, %141, %142 : vector<1x256xi32>
    %144 = arith.andi %139, %143 : vector<1x256xi1>
    %cst_78 = arith.constant 0.000000e+00 : f32
    %145 = vector.broadcast %cst_78 : f32 to vector<8x256xf32>
    %146 = vector.shape_cast %144 : vector<1x256xi1> to vector<1x256xi1>
    %147 = vector.broadcast %146 : vector<1x256xi1> to vector<8x256xi1>
    %148 = arith.select %147, %135, %145 : vector<8x256xi1>, vector<8x256xf32>
    %c8 = arith.constant 8 : index
    %c0_79 = arith.constant 0 : index
    %c0_80 = arith.constant 0 : index
    %149 = vector.load %arg4[%c8, %c0_79, %c0_80] : memref<9x8x8xf32, #tpu.memory_space<vmem>>, vector<1x8x8xf32>
    %150 = vector.shape_cast %149 : vector<1x8x8xf32> to vector<8x8xf32>
    %cst_81 = arith.constant dense<0.000000e+00> : vector<8x256xf32>
    %151 = tpu.matmul %150, %148, %cst_81 {dimension_numbers = #tpu.dot_dimension_numbers<[1], [0], [0], [1], [0, 0, 1, 1], [], []>} : vector<8x8xf32>, vector<8x256xf32>, vector<8x256xf32> -> vector<8x256xf32>
    %152 = arith.addf %134, %151 : vector<8x256xf32>
    %c0_82 = arith.constant 0 : index
    %c0_83 = arith.constant 0 : index
    %153 = vector.load %arg5[%c0_82, %c0_83] : memref<8x1xf32, #tpu.memory_space<vmem>>, vector<8x1xf32>
    %154 = vector.broadcast %153 : vector<8x1xf32> to vector<8x256xf32>
    %155 = arith.addf %152, %154 : vector<8x256xf32>
    %cst_84 = arith.constant 0.000000e+00 : f32
    %156 = vector.broadcast %cst_84 : f32 to vector<8x256xf32>
    %157 = arith.maximumf %155, %156 : vector<8x256xf32>
    %c0_85 = arith.constant 0 : index
    %c0_86 = arith.constant 0 : index
    %158 = vector.load %arg6[%c0_85, %c0_86] : memref<8x8xf32, #tpu.memory_space<vmem>>, vector<8x8xf32>
    %cst_87 = arith.constant dense<0.000000e+00> : vector<8x256xf32>
    %159 = tpu.matmul %158, %157, %cst_87 {dimension_numbers = #tpu.dot_dimension_numbers<[1], [0], [0], [1], [0, 0, 1, 1], [], []>} : vector<8x8xf32>, vector<8x256xf32>, vector<8x256xf32> -> vector<8x256xf32>
    %c0_88 = arith.constant 0 : index
    %c0_89 = arith.constant 0 : index
    %160 = vector.load %arg7[%c0_88, %c0_89] : memref<8x1xf32, #tpu.memory_space<vmem>>, vector<8x1xf32>
    %161 = vector.broadcast %160 : vector<8x1xf32> to vector<8x256xf32>
    %162 = arith.addf %159, %161 : vector<8x256xf32>
    %163 = arith.addf %162, %1 : vector<8x256xf32>
    %c0_90 = arith.constant 0 : index
    %c0_91 = arith.constant 0 : index
    %c0_92 = arith.constant 0 : index
    %164 = vector.load %arg8[%c0_90, %c0_91, %c0_92] : memref<1x8x256xf32, #tpu.memory_space<vmem>>, vector<1x8x256xf32>
    %165 = vector.shape_cast %164 : vector<1x8x256xf32> to vector<8x256xf32>
    %166 = vector.shape_cast %163 : vector<8x256xf32> to vector<1x8x256xf32>
    tpu.vector_store %arg8[%c0_90, %c0_91, %c0_92], %166 {strides = array<i32>} : memref<1x8x256xf32, #tpu.memory_space<vmem>>, vector<1x8x256xf32>,
    return
  }
  func.func @transform_0(%arg0: i32) -> (i32, i32, i32) {
    %c0_i32 = arith.constant 0 : i32
    %c0_i32_0 = arith.constant 0 : i32
    %c0_i32_1 = arith.constant 0 : i32
    return %arg0, %c0_i32, %c0_i32_0 : i32, i32, i32
  }
  func.func @transform_1(%arg0: i32) -> (i32, i32) {
    %c0_i32 = arith.constant 0 : i32
    %c0_i32_0 = arith.constant 0 : i32
    %c0_i32_1 = arith.constant 0 : i32
    return %c0_i32, %c0_i32_0 : i32, i32
  }
  func.func @transform_2(%arg0: i32) -> (i32, i32) {
    %c0_i32 = arith.constant 0 : i32
    %c0_i32_0 = arith.constant 0 : i32
    %c0_i32_1 = arith.constant 0 : i32
    return %c0_i32, %c0_i32_0 : i32, i32
  }
  func.func @transform_3(%arg0: i32) -> (i32, i32, i32) {
    %c0_i32 = arith.constant 0 : i32
    %c0_i32_0 = arith.constant 0 : i32
    %c0_i32_1 = arith.constant 0 : i32
    %c0_i32_2 = arith.constant 0 : i32
    return %c0_i32, %c0_i32_0, %c0_i32_1 : i32, i32, i32
  }
  func.func @transform_4(%arg0: i32) -> (i32, i32) {
    %c0_i32 = arith.constant 0 : i32
    %c0_i32_0 = arith.constant 0 : i32
    %c0_i32_1 = arith.constant 0 : i32
    return %c0_i32, %c0_i32_0 : i32, i32
  }
  func.func @transform_5(%arg0: i32) -> (i32, i32) {
    %c0_i32 = arith.constant 0 : i32
    %c0_i32_0 = arith.constant 0 : i32
    %c0_i32_1 = arith.constant 0 : i32
    return %c0_i32, %c0_i32_0 : i32, i32
  }
  func.func @transform_6(%arg0: i32) -> (i32, i32) {
    %c0_i32 = arith.constant 0 : i32
    %c0_i32_0 = arith.constant 0 : i32
    %c0_i32_1 = arith.constant 0 : i32
    return %c0_i32, %c0_i32_0 : i32, i32
  }
  func.func @transform_7(%arg0: i32) -> (i32, i32, i32) {
    %c0_i32 = arith.constant 0 : i32
    %c0_i32_0 = arith.constant 0 : i32
    %c0_i32_1 = arith.constant 0 : i32
    return %arg0, %c0_i32, %c0_i32_0 : i32, i32, i32
  }
}

</mosaic_0001>

<llo_original>
// kernel: res_bottleneck_forward.1
$region0: #{res_bottleneck_forward.1}
  #allocation0 [shape = 'u32[]', space=smem, size = 0x4, offset = 0x4, fixed_abs, tag = 'smem constant byte address 0x4 - core index']
  #allocation1 [shape = 'u32[72,128]{1,0:T(1,128)}', space=vmem, size = 0x9000, scoped, tag = 'internal scratch']
  #allocation2 [shape = 'f32[8,512]{1,0:T(8,128)}', space=vmem, size = 0x4000, scoped, tag = 'scratch operand']
  %s0 = inlined_call_operand.vmem [shape: f32[2,8,256], index: 0, kind: input, shape index: {}]
  %s1 = inlined_call_operand.vmem [shape: f32[8,8], index: 1, kind: input, shape index: {}]
  %s2 = inlined_call_operand.vmem [shape: f32[8,1], index: 2, kind: input, shape index: {}]
  %s3 = inlined_call_operand.vmem [shape: f32[9,8,8], index: 3, kind: input, shape index: {}]
  %s4 = inlined_call_operand.vmem [shape: f32[8,1], index: 4, kind: input, shape index: {}]
  %s5 = inlined_call_operand.vmem [shape: f32[8,8], index: 5, kind: input, shape index: {}]
  %s6 = inlined_call_operand.vmem [shape: f32[8,1], index: 6, kind: input, shape index: {}]
  %s7 = inlined_call_operand.vmem [shape: f32[2,8,256], index: 7, kind: output, shape index: {}]
  %s8 = sld [smem:[#allocation0]]
  $region61: #{res_bottleneck_forward.1} parent=0
    _
  %s10 = ssub.s32 1, %s8
  %s11 = scalar_select 0, %s10, %s8
  loop: start=0, step=1, limit=4
  $region2: #{res_bottleneck_forward.1} parent=0 // loop_pre_header
    _
  $region3: #{res_bottleneck_forward.1} parent=0 // loop_header
    %s13 = sphi 0, %s17
    %p14 = scmp.ge.s32.totalorder %s13, 4
    %s23 = sphi 0, %s25
    %s26 = sphi 0, %s23
    %s27 = sphi 0, %s26
    %s43 = sphi 0, %s27
    %s47 = sphi 0, %s47
    %s49 = sphi 0, %s47
    %s50 = sphi 0, %s49
    %s64 = sphi 0, %s50
    %s68 = sphi 0, %s68
    %s70 = sphi 0, %s68
    %s71 = sphi 0, %s70
    %s85 = sphi 0, %s71
    %s89 = sphi 0, %s89
    %s91 = sphi 0, %s89
    %s92 = sphi 0, %s91
    %s106 = sphi 0, %s92
    %s110 = sphi 0, %s110
    %s112 = sphi 0, %s110
    %s113 = sphi 0, %s112
    %s127 = sphi 0, %s113
    %s131 = sphi 0, %s131
    %s133 = sphi 0, %s131
    %s134 = sphi 0, %s133
    %s148 = sphi 0, %s134
    %s152 = sphi 0, %s152
    %s154 = sphi 0, %s152
    %s155 = sphi 0, %s154
    %s169 = sphi 0, %s155
    %s175 = sphi 0, %s177
    %s178 = sphi 0, %s175
    %s179 = sphi 0, %s178
    %s195 = sphi 0, %s179
  $region4: #{res_bottleneck_forward.1} parent=0 // loop_header_branch
    %16 = sbr.rel (%p14) target = $region8
  $region5: #{res_bottleneck_forward.1} parent=0 // loop_body
    %s18 = ssub.s32 %s13, 1
    %s19 = ssub.s32 %s13, 2
    %s20 = sadd.s32 %s13, 1
    %s21 = ssub.s32 %s13, %s20
    %p22 = scmp.eq.s32.totalorder %s21, 0
    %s24 = sadd.s32 %s23, 1
    %s25 = scalar_select %p22, %s23, %s24
    %p28 = pneg %p22
    %p29 = scmp.eq.s32.totalorder %s13, 1
    %p30 = por %p28, %p29
    %p31 = scmp.ne.s32.totalorder %s23, %s26
    %p32 = scmp.eq.s32.totalorder %s13, 0
    %p33 = por %p31, %p32
    %p34 = scmp.ne.s32.totalorder %s23, %s26
    %p35 = scmp.eq.s32.totalorder %s18, 1
    %p36 = por %p34, %p35
    %p37 = scmp.ne.s32.totalorder %s26, %s27
    %p38 = scmp.eq.s32.totalorder %s18, 0
    %p39 = por %p37, %p38
    %p40 = scmp.ne.s32.totalorder %s26, %s27
    %p41 = scmp.eq.s32.totalorder %s19, 1
    %p42 = por %p40, %p41
    %p44 = scmp.ne.s32.totalorder %s27, %s43
    %p45 = scmp.eq.s32.totalorder %s19, 0
    %p46 = por %p44, %p45
    %s48 = sadd.s32 %s47, 1
    %p51 = scmp.eq.s32.totalorder %s13, 1
    %p52 = scmp.ne.s32.totalorder %s47, %s49
    %p53 = scmp.eq.s32.totalorder %s13, 0
    %p54 = por %p52, %p53
    %p55 = scmp.ne.s32.totalorder %s47, %s49
    %p56 = scmp.eq.s32.totalorder %s18, 1
    %p57 = por %p55, %p56
    %p58 = scmp.ne.s32.totalorder %s49, %s50
    %p59 = scmp.eq.s32.totalorder %s18, 0
    %p60 = por %p58, %p59
    %p61 = scmp.ne.s32.totalorder %s49, %s50
    %p62 = scmp.eq.s32.totalorder %s19, 1
    %p63 = por %p61, %p62
    %p65 = scmp.ne.s32.totalorder %s50, %s64
    %p66 = scmp.eq.s32.totalorder %s19, 0
    %p67 = por %p65, %p66
    %s69 = sadd.s32 %s68, 1
    %p72 = scmp.eq.s32.totalorder %s13, 1
    %p73 = scmp.ne.s32.totalorder %s68, %s70
    %p74 = scmp.eq.s32.totalorder %s13, 0
    %p75 = por %p73, %p74
    %p76 = scmp.ne.s32.totalorder %s68, %s70
    %p77 = scmp.eq.s32.totalorder %s18, 1
    %p78 = por %p76, %p77
    %p79 = scmp.ne.s32.totalorder %s70, %s71
    %p80 = scmp.eq.s32.totalorder %s18, 0
    %p81 = por %p79, %p80
    %p82 = scmp.ne.s32.totalorder %s70, %s71
    %p83 = scmp.eq.s32.totalorder %s19, 1
    %p84 = por %p82, %p83
    %p86 = scmp.ne.s32.totalorder %s71, %s85
    %p87 = scmp.eq.s32.totalorder %s19, 0
    %p88 = por %p86, %p87
    %s90 = sadd.s32 %s89, 1
    %p93 = scmp.eq.s32.totalorder %s13, 1
    %p94 = scmp.ne.s32.totalorder %s89, %s91
    %p95 = scmp.eq.s32.totalorder %s13, 0
    %p96 = por %p94, %p95
    %p97 = scmp.ne.s32.totalorder %s89, %s91
    %p98 = scmp.eq.s32.totalorder %s18, 1
    %p99 = por %p97, %p98
    %p100 = scmp.ne.s32.totalorder %s91, %s92
    %p101 = scmp.eq.s32.totalorder %s18, 0
    %p102 = por %p100, %p101
    %p103 = scmp.ne.s32.totalorder %s91, %s92
    %p104 = scmp.eq.s32.totalorder %s19, 1
    %p105 = por %p103, %p104
    %p107 = scmp.ne.s32.totalorder %s92, %s106
    %p108 = scmp.eq.s32.totalorder %s19, 0
    %p109 = por %p107, %p108
    %s111 = sadd.s32 %s110, 1
    %p114 = scmp.eq.s32.totalorder %s13, 1
    %p115 = scmp.ne.s32.totalorder %s110, %s112
    %p116 = scmp.eq.s32.totalorder %s13, 0
    %p117 = por %p115, %p116
    %p118 = scmp.ne.s32.totalorder %s110, %s112
    %p119 = scmp.eq.s32.totalorder %s18, 1
    %p120 = por %p118, %p119
    %p121 = scmp.ne.s32.totalorder %s112, %s113
    %p122 = scmp.eq.s32.totalorder %s18, 0
    %p123 = por %p121, %p122
    %p124 = scmp.ne.s32.totalorder %s112, %s113
    %p125 = scmp.eq.s32.totalorder %s19, 1
    %p126 = por %p124, %p125
    %p128 = scmp.ne.s32.totalorder %s113, %s127
    %p129 = scmp.eq.s32.totalorder %s19, 0
    %p130 = por %p128, %p129
    %s132 = sadd.s32 %s131, 1
    %p135 = scmp.eq.s32.totalorder %s13, 1
    %p136 = scmp.ne.s32.totalorder %s131, %s133
    %p137 = scmp.eq.s32.totalorder %s13, 0
    %p138 = por %p136, %p137
    %p139 = scmp.ne.s32.totalorder %s131, %s133
    %p140 = scmp.eq.s32.totalorder %s18, 1
    %p141 = por %p139, %p140
    %p142 = scmp.ne.s32.totalorder %s133, %s134
    %p143 = scmp.eq.s32.totalorder %s18, 0
    %p144 = por %p142, %p143
    %p145 = scmp.ne.s32.totalorder %s133, %s134
    %p146 = scmp.eq.s32.totalorder %s19, 1
    %p147 = por %p145, %p146
    %p149 = scmp.ne.s32.totalorder %s134, %s148
    %p150 = scmp.eq.s32.totalorder %s19, 0
    %p151 = por %p149, %p150
    %s153 = sadd.s32 %s152, 1
    %p156 = scmp.eq.s32.totalorder %s13, 1
    %p157 = scmp.ne.s32.totalorder %s152, %s154
    %p158 = scmp.eq.s32.totalorder %s13, 0
    %p159 = por %p157, %p158
    %p160 = scmp.ne.s32.totalorder %s152, %s154
    %p161 = scmp.eq.s32.totalorder %s18, 1
    %p162 = por %p160, %p161
    %p163 = scmp.ne.s32.totalorder %s154, %s155
    %p164 = scmp.eq.s32.totalorder %s18, 0
    %p165 = por %p163, %p164
    %p166 = scmp.ne.s32.totalorder %s154, %s155
    %p167 = scmp.eq.s32.totalorder %s19, 1
    %p168 = por %p166, %p167
    %p170 = scmp.ne.s32.totalorder %s155, %s169
    %p171 = scmp.eq.s32.totalorder %s19, 0
    %p172 = por %p170, %p171
    %s173 = ssub.s32 %s13, %s20
    %p174 = scmp.eq.s32.totalorder %s173, 0
    %s176 = sadd.s32 %s175, 1
    %s177 = scalar_select %p174, %s175, %s176
    %p180 = pneg %p174
    %p181 = scmp.eq.s32.totalorder %s13, 1
    %p182 = por %p180, %p181
    %p183 = scmp.ne.s32.totalorder %s175, %s178
    %p184 = scmp.eq.s32.totalorder %s13, 0
    %p185 = por %p183, %p184
    %p186 = scmp.ne.s32.totalorder %s175, %s178
    %p187 = scmp.eq.s32.totalorder %s18, 1
    %p188 = por %p186, %p187
    %p189 = scmp.ne.s32.totalorder %s178, %s179
    %p190 = scmp.eq.s32.totalorder %s18, 0
    %p191 = por %p189, %p190
    %p192 = scmp.ne.s32.totalorder %s178, %s179
    %p193 = scmp.eq.s32.totalorder %s19, 1
    %p194 = por %p192, %p193
    %p196 = scmp.ne.s32.totalorder %s179, %s195
    %p197 = scmp.eq.s32.totalorder %s19, 0
    %p198 = por %p196, %p197
    %p199 = scmp.le.s32.totalorder 1, %s13
    %p200 = scmp.lt.s32.totalorder %s13, 3
    %p201 = pnand %p199, %p200
    %p202 = pneg %p201
    // Predicated region
    $region9: #{res_bottleneck_forward.1} parent=5 // pred_check
      _
    $region10: #{res_bottleneck_forward.1} parent=5 // pred_check_branch
      %204 = sbr.rel (%p201) target = $region12
    $region11: #{res_bottleneck_forward.1} parent=5 // pred_region
      %s205 = ssub.s32 %s13, 1
      // Predicated region
      $region13: #{res_bottleneck_forward.1} parent=11 // pred_check
        %p206 = pneg %p60
      $region14: #{res_bottleneck_forward.1} parent=11 // pred_check_branch
        %208 = sbr.rel (%p206) target = $region16
      $region15: #{res_bottleneck_forward.1} parent=11 // pred_region
        _
      $region16: #{res_bottleneck_forward.1} parent=11 // pred_fallthru
        _
      // Predicated region
      $region17: #{res_bottleneck_forward.1} parent=11 // pred_check
        %p209 = pneg %p81
      $region18: #{res_bottleneck_forward.1} parent=11 // pred_check_branch
        %211 = sbr.rel (%p209) target = $region20
      $region19: #{res_bottleneck_forward.1} parent=11 // pred_region
        _
      $region20: #{res_bottleneck_forward.1} parent=11 // pred_fallthru
        _
      // Predicated region
      $region21: #{res_bottleneck_forward.1} parent=11 // pred_check
        %p212 = pneg %p102
      $region22: #{res_bottleneck_forward.1} parent=11 // pred_check_branch
        %214 = sbr.rel (%p212) target = $region24
      $region23: #{res_bottleneck_forward.1} parent=11 // pred_region
        _
      $region24: #{res_bottleneck_forward.1} parent=11 // pred_fallthru
        _
      // Predicated region
      $region25: #{res_bottleneck_forward.1} parent=11 // pred_check
        %p215 = pneg %p123
      $region26: #{res_bottleneck_forward.1} parent=11 // pred_check_branch
        %217 = sbr.rel (%p215) target = $region28
      $region27: #{res_bottleneck_forward.1} parent=11 // pred_region
        _
      $region28: #{res_bottleneck_forward.1} parent=11 // pred_fallthru
        _
      // Predicated region
      $region29: #{res_bottleneck_forward.1} parent=11 // pred_check
        %p218 = pneg %p144
      $region30: #{res_bottleneck_forward.1} parent=11 // pred_check_branch
        %220 = sbr.rel (%p218) target = $region32
      $region31: #{res_bottleneck_forward.1} parent=11 // pred_region
        _
      $region32: #{res_bottleneck_forward.1} parent=11 // pred_fallthru
        _
      // Predicated region
      $region33: #{res_bottleneck_forward.1} parent=11 // pred_check
        %p221 = pneg %p165
      $region34: #{res_bottleneck_forward.1} parent=11 // pred_check_branch
        %223 = sbr.rel (%p221) target = $region36
      $region35: #{res_bottleneck_forward.1} parent=11 // pred_region
        _
      $region36: #{res_bottleneck_forward.1} parent=11 // pred_fallthru
        _
    $region12: #{res_bottleneck_forward.1} parent=5 // pred_fallthru
      _
    %p224 = scmp.lt.s32.totalorder %s13, 2
    // Predicated region
    $region37: #{res_bottleneck_forward.1} parent=5 // pred_check
      %p225 = pneg %p224
    $region38: #{res_bottleneck_forward.1} parent=5 // pred_check_branch
      %227 = sbr.rel (%p225) target = $region40
    $region39: #{res_bottleneck_forward.1} parent=5 // pred_region
      // Predicated region
      $region41: #{res_bottleneck_forward.1} parent=39 // pred_check
        %p228 = pneg %p33
      $region42: #{res_bottleneck_forward.1} parent=39 // pred_check_branch
        %230 = sbr.rel (%p228) target = $region44
      $region43: #{res_bottleneck_forward.1} parent=39 // pred_region
        %p231 = scmp.lt.s32.totalorder %s13, 1
        %s232 = scalar_select %p231, %s13, 1
        %s233 = smul.addr %s232, 2
        %s234 = smul.addr %s233, 8
        %s235 = scalar_lea.vmem %s0, %s234
      $region44: #{res_bottleneck_forward.1} parent=39 // pred_fallthru
        _
    $region40: #{res_bottleneck_forward.1} parent=5 // pred_fallthru
      _
    %p236 = scmp.le.s32.totalorder 1, %s13
    %p237 = scmp.lt.s32.totalorder %s13, 3
    %p238 = pnand %p236, %p237
    %p239 = pneg %p238
    // Predicated region
    $region45: #{res_bottleneck_forward.1} parent=5 // pred_check
      _
    $region46: #{res_bottleneck_forward.1} parent=5 // pred_check_branch
      %241 = sbr.rel (%p238) target = $region48
    $region47: #{res_bottleneck_forward.1} parent=5 // pred_region
      %s242 = ssub.s32 %s13, 1
      %p243 = scmp.lt.s32.totalorder %s18, 1
      %s244 = scalar_select %p243, %s18, 1
      %s245 = smul.addr %s244, 2
      %s246 = smul.addr %s245, 8
      %s247 = scalar_lea.vmem %s0, %s246
      %p248 = pneg %p39
      %p249 = pneg %p36
      %p250 = pneg %p60
      %p251 = pneg %p57
      %p252 = pneg %p81
      %p253 = pneg %p78
      %p254 = pneg %p102
      %p255 = pneg %p99
      %p256 = pneg %p123
      %p257 = pneg %p120
      %p258 = pneg %p144
      %p259 = pneg %p141
      %p260 = pneg %p165
      %p261 = pneg %p162
      %p262 = pneg %p191
      %p263 = pneg %p188
      %p264 = scmp.lt.s32.totalorder %s18, 1
      %s265 = scalar_select %p264, %s18, 1
      %s266 = smul.addr %s265, 2
      %s267 = smul.addr %s266, 8
      %s268 = scalar_lea.vmem %s7, %s267
      %p269 = scmp.lt.s32.totalorder %s18, 1
      %s270 = scalar_select %p269, %s18, 1
      %s271 = smul.addr %s270, 2
      %s272 = smul.addr %s271, 8
      %s273 = scalar_lea.vmem %s0, %s272
      %p274 = scmp.lt.s32.totalorder %s18, 1
      %s275 = scalar_select %p274, %s18, 1
      %s276 = smul.addr %s275, 2
      %s277 = smul.addr %s276, 8
      %s278 = scalar_lea.vmem %s7, %s277
      %v279 = vld [vmem:[%s273] sm:$0xff]
      %v280 = vld [vmem:[%s273 + $0x8] sm:$0xff]
      %v281 = vld [vmem:[%s1] sm:$0xff]
      %v282 = vld [vmem:[%s2] sm:$0xff]
      %284 = vset.pattern.permute.xlu0 0
      %285 = vperm.xlu0 %284, %v282
      %v286 = vpop.permute.xlu0 %285
      %vm288 = vcmask 64512
      %v290 = vsel %vm288, %v281, 0
      %292 = vmatpush.msra.mxu0 0.0
      %293 = vmatpush.msra.mxu0 0.0
      %294 = vmatpush.msra.mxu0 0.0
      %295 = vmatpush.msra.mxu0 0.0
      %296 = vmatpush.msra.mxu0 0.0
      %297 = vmatpush.msra.mxu0 0.0
      %298 = vmatpush.msra.mxu0 0.0
      %299 = vmatpush.msra.mxu0 0.0
      %300 = vmatpush.msra.mxu0 0.0
      %301 = vmatpush.msra.mxu0 0.0
      %302 = vmatpush.msra.mxu0 0.0
      %303 = vmatpush.msra.mxu0 0.0
      %304 = vmatpush.msra.mxu0 0.0
      %305 = vmatpush.msra.mxu0 0.0
      %306 = vmatpush.msra.mxu0 0.0
      %307 = vmatpush.msra.mxu0 %v279
      %308 = vmatmul.f32.gmra.mxu0 %v290
      %v309 = vpop.f32.mrf.mxu0
      %v310 = vadd.f32 %v286, %v309
      %311 = vdwg.mxu0
      %312 = vmatpush.msra.mxu0 0.0
      %313 = vmatpush.msra.mxu0 0.0
      %314 = vmatpush.msra.mxu0 0.0
      %315 = vmatpush.msra.mxu0 0.0
      %316 = vmatpush.msra.mxu0 0.0
      %317 = vmatpush.msra.mxu0 0.0
      %318 = vmatpush.msra.mxu0 0.0
      %319 = vmatpush.msra.mxu0 0.0
      %320 = vmatpush.msra.mxu0 0.0
      %321 = vmatpush.msra.mxu0 0.0
      %322 = vmatpush.msra.mxu0 0.0
      %323 = vmatpush.msra.mxu0 0.0
      %324 = vmatpush.msra.mxu0 0.0
      %325 = vmatpush.msra.mxu0 0.0
      %326 = vmatpush.msra.mxu0 0.0
      %327 = vmatpush.msra.mxu0 %v280
      %328 = vmatmul.f32.gmra.mxu0 %v290
      %v329 = vpop.f32.mrf.mxu0
      %v330 = vadd.f32 %v286, %v329
      %331 = vdwg.mxu0
      %v332 = vmax.f32 %v310, 0.0
      %v333 = vmax.f32 %v330, 0.0
      %334 = vst [vmem:[#allocation2] sm:$0xff] 0.0
      %335 = vst [vmem:[#allocation2 + $0x8] sm:$0xff] 0.0
      %336 = vst [vmem:[#allocation2 + $0x10] sm:$0xff] 0.0
      %337 = vst [vmem:[#allocation2 + $0x18] sm:$0xff] 0.0
      %338 = vst [vmem:[#allocation2 + $0x8] sm:$0xff] %v332
      %339 = vst [vmem:[#allocation2 + $0x10] sm:$0xff] %v333
      %v340 = vlaneseq
      %v341 = vand.u32 %v340, 127
      %v342 = vadd.s32 %v341, 128
      %vm343 = vcmp.lt.s32.totalorder %v341, 0
      %v344 = vsub.s32 0, %v341
      %v345 = vsel %vm343, %v344, %v341
      %v346 = vshrl.u32 %v345, 4
      %v347 = vand.u32 %v345, 15
      %v348 = vsub.s32 0, %v347
      %v349 = vsel %vm343, %v348, %v347
      %vm350 = vcmp.lt.s32.totalorder %v342, 0
      %v351 = vsub.s32 0, %v342
      %v352 = vsel %vm350, %v351, %v342
      %v353 = vshrl.u32 %v352, 4
      %v354 = vand.u32 %v352, 15
      %v355 = vsub.s32 0, %v354
      %v356 = vsel %vm350, %v355, %v354
      %vm357 = vcmp.ne.s32.totalorder %v349, 0
      %vm358 = vcmp.ne.s32.totalorder %v356, 0
      %vm359 = vcmp.lt.s32.totalorder %v349, 0
      %vm360 = vcmp.lt.s32.totalorder %v356, 0
      %vm361 = vmand %vm359, %vm357
      %vm362 = vmand %vm360, %vm358
      %v363 = vadd.s32 %v349, 16
      %v364 = vadd.s32 %v356, 16
      %v365 = vsel %vm361, %v363, %v349
      %v366 = vsel %vm362, %v364, %v356
      %v367 = vld [vmem:[#allocation2] sm:$0xff]
      %v368 = vld [vmem:[#allocation2 + $0x8] sm:$0xff]
      %v369 = vld [vmem:[#allocation2 + $0x10] sm:$0xff]
      %v370 = vadd.s32 %v365, 4294967295
      %v371 = vadd.s32 %v366, 4294967295
      %vm372 = vcmp.ge.s32.totalorder %v370, 0
      %vm373 = vcmp.ge.s32.totalorder %v371, 0
      %vm374 = vcmp.lt.s32.totalorder %v370, 16
      %vm375 = vcmp.lt.s32.totalorder %v371, 16
      %vm376 = vmand %vm372, %vm374
      %vm377 = vmand %vm373, %vm375
      %v378 = vsel %vm376, 1, 0
      %v379 = vsel %vm377, 1, 0
      %vm380 = vcmp.eq.s32.totalorder %v378, 1
      %vm381 = vcmp.eq.s32.totalorder %v379, 1
      %385 = vrot.lane.b32.xlu0 %v367, 17
      %v386 = vpop.permute.xlu0 %385
      %387 = vrot.lane.b32.xlu0 %v368, 17
      %v388 = vpop.permute.xlu0 %387
      %389 = vrot.lane.b32.xlu0 %v369, 17
      %v390 = vpop.permute.xlu0 %389
      %vm391 = vcmask 138240
      %v392 = vsel %vm391, %v386, %v388
      %v393 = vsel %vm391, %v388, %v390
      %v396 = vsel %vm380, %v392, 0.0
      %v397 = vsel %vm381, %v393, 0.0
      %v398 = vld [vmem:[%s3] sm:$0xff]
      %s399 = scalar_lea.vmem %s3, 8
      %v400 = vld [vmem:[%s399] sm:$0xff]
      %401 = vrot.lane.b32.xlu0 %v367, 16
      %v402 = vpop.permute.xlu0 %401
      %403 = vrot.lane.b32.xlu0 %v368, 16
      %v404 = vpop.permute.xlu0 %403
      %405 = vrot.lane.b32.xlu0 %v369, 16
      %v406 = vpop.permute.xlu0 %405
      %vm407 = vcmask 130048
      %v408 = vsel %vm407, %v402, %v404
      %v409 = vsel %vm407, %v404, %v406
      %v413 = vsel %vm288, %v400, 0
      %415 = vmatpush.msra.mxu0 0.0
      %416 = vmatpush.msra.mxu0 0.0
      %417 = vmatpush.msra.mxu0 0.0
      %418 = vmatpush.msra.mxu0 0.0
      %419 = vmatpush.msra.mxu0 0.0
      %420 = vmatpush.msra.mxu0 0.0
      %421 = vmatpush.msra.mxu0 0.0
      %422 = vmatpush.msra.mxu0 0.0
      %423 = vmatpush.msra.mxu0 0.0
      %424 = vmatpush.msra.mxu0 0.0
      %425 = vmatpush.msra.mxu0 0.0
      %426 = vmatpush.msra.mxu0 0.0
      %427 = vmatpush.msra.mxu0 0.0
      %428 = vmatpush.msra.mxu0 0.0
      %429 = vmatpush.msra.mxu0 0.0
      %430 = vmatpush.msra.mxu0 %v408
      %431 = vmatmul.f32.gmra.mxu0 %v413
      %v432 = vpop.f32.mrf.mxu0
      %v433 = vadd.f32 0.0, %v432
      %434 = vdwg.mxu0
      %435 = vmatpush.msra.mxu0 0.0
      %436 = vmatpush.msra.mxu0 0.0
      %437 = vmatpush.msra.mxu0 0.0
      %438 = vmatpush.msra.mxu0 0.0
      %439 = vmatpush.msra.mxu0 0.0
      %440 = vmatpush.msra.mxu0 0.0
      %441 = vmatpush.msra.mxu0 0.0
      %442 = vmatpush.msra.mxu0 0.0
      %443 = vmatpush.msra.mxu0 0.0
      %444 = vmatpush.msra.mxu0 0.0
      %445 = vmatpush.msra.mxu0 0.0
      %446 = vmatpush.msra.mxu0 0.0
      %447 = vmatpush.msra.mxu0 0.0
      %448 = vmatpush.msra.mxu0 0.0
      %449 = vmatpush.msra.mxu0 0.0
      %450 = vmatpush.msra.mxu0 %v409
      %451 = vmatmul.f32.gmra.mxu0 %v413
      %v452 = vpop.f32.mrf.mxu0
      %v453 = vadd.f32 0.0, %v452
      %454 = vdwg.mxu0
      %v456 = vsel %vm288, %v398, 0
      %458 = vmatpush.msra.mxu0 0.0
      %459 = vmatpush.msra.mxu0 0.0
      %460 = vmatpush.msra.mxu0 0.0
      %461 = vmatpush.msra.mxu0 0.0
      %462 = vmatpush.msra.mxu0 0.0
      %463 = vmatpush.msra.mxu0 0.0
      %464 = vmatpush.msra.mxu0 0.0
      %465 = vmatpush.msra.mxu0 0.0
      %466 = vmatpush.msra.mxu0 0.0
      %467 = vmatpush.msra.mxu0 0.0
      %468 = vmatpush.msra.mxu0 0.0
      %469 = vmatpush.msra.mxu0 0.0
      %470 = vmatpush.msra.mxu0 0.0
      %471 = vmatpush.msra.mxu0 0.0
      %472 = vmatpush.msra.mxu0 0.0
      %473 = vmatpush.msra.mxu0 %v396
      %474 = vmatmul.f32.gmra.mxu0 %v456
      %v475 = vpop.f32.mrf.mxu0
      %v476 = vadd.f32 %v433, %v475
      %477 = vdwg.mxu0
      %478 = vmatpush.msra.mxu0 0.0
      %479 = vmatpush.msra.mxu0 0.0
      %480 = vmatpush.msra.mxu0 0.0
      %481 = vmatpush.msra.mxu0 0.0
      %482 = vmatpush.msra.mxu0 0.0
      %483 = vmatpush.msra.mxu0 0.0
      %484 = vmatpush.msra.mxu0 0.0
      %485 = vmatpush.msra.mxu0 0.0
      %486 = vmatpush.msra.mxu0 0.0
      %487 = vmatpush.msra.mxu0 0.0
      %488 = vmatpush.msra.mxu0 0.0
      %489 = vmatpush.msra.mxu0 0.0
      %490 = vmatpush.msra.mxu0 0.0
      %491 = vmatpush.msra.mxu0 0.0
      %492 = vmatpush.msra.mxu0 0.0
      %493 = vmatpush.msra.mxu0 %v397
      %494 = vmatmul.f32.gmra.mxu0 %v456
      %v495 = vpop.f32.mrf.mxu0
      %v496 = vadd.f32 %v453, %v495
      %497 = vdwg.mxu0
      %v498 = vadd.s32 %v365, 1
      %v499 = vadd.s32 %v366, 1
      %vm500 = vcmp.ge.s32.totalorder %v498, 0
      %vm501 = vcmp.ge.s32.totalorder %v499, 0
      %vm502 = vcmp.lt.s32.totalorder %v498, 16
      %vm503 = vcmp.lt.s32.totalorder %v499, 16
      %vm504 = vmand %vm500, %vm502
      %vm505 = vmand %vm501, %vm503
      %v506 = vsel %vm504, 1, 0
      %v507 = vsel %vm505, 1, 0
      %vm508 = vcmp.eq.s32.totalorder %v506, 1
      %vm509 = vcmp.eq.s32.totalorder %v507, 1
      %510 = vrot.lane.b32.xlu0 %v367, 15
      %v511 = vpop.permute.xlu0 %510
      %512 = vrot.lane.b32.xlu0 %v368, 15
      %v513 = vpop.permute.xlu0 %512
      %514 = vrot.lane.b32.xlu0 %v369, 15
      %v515 = vpop.permute.xlu0 %514
      %vm516 = vcmask 121856
      %v517 = vsel %vm516, %v511, %v513
      %v518 = vsel %vm516, %v513, %v515
      %v521 = vsel %vm508, %v517, 0.0
      %v522 = vsel %vm509, %v518, 0.0
      %s523 = scalar_lea.vmem %s3, 16
      %v524 = vld [vmem:[%s523] sm:$0xff]
      %v526 = vsel %vm288, %v524, 0
      %528 = vmatpush.msra.mxu0 0.0
      %529 = vmatpush.msra.mxu0 0.0
      %530 = vmatpush.msra.mxu0 0.0
      %531 = vmatpush.msra.mxu0 0.0
      %532 = vmatpush.msra.mxu0 0.0
      %533 = vmatpush.msra.mxu0 0.0
      %534 = vmatpush.msra.mxu0 0.0
      %535 = vmatpush.msra.mxu0 0.0
      %536 = vmatpush.msra.mxu0 0.0
      %537 = vmatpush.msra.mxu0 0.0
      %538 = vmatpush.msra.mxu0 0.0
      %539 = vmatpush.msra.mxu0 0.0
      %540 = vmatpush.msra.mxu0 0.0
      %541 = vmatpush.msra.mxu0 0.0
      %542 = vmatpush.msra.mxu0 0.0
      %543 = vmatpush.msra.mxu0 %v521
      %544 = vmatmul.f32.gmra.mxu0 %v526
      %v545 = vpop.f32.mrf.mxu0
      %v546 = vadd.f32 0.0, %v545
      %547 = vdwg.mxu0
      %548 = vmatpush.msra.mxu0 0.0
      %549 = vmatpush.msra.mxu0 0.0
      %550 = vmatpush.msra.mxu0 0.0
      %551 = vmatpush.msra.mxu0 0.0
      %552 = vmatpush.msra.mxu0 0.0
      %553 = vmatpush.msra.mxu0 0.0
      %554 = vmatpush.msra.mxu0 0.0
      %555 = vmatpush.msra.mxu0 0.0
      %556 = vmatpush.msra.mxu0 0.0
      %557 = vmatpush.msra.mxu0 0.0
      %558 = vmatpush.msra.mxu0 0.0
      %559 = vmatpush.msra.mxu0 0.0
      %560 = vmatpush.msra.mxu0 0.0
      %561 = vmatpush.msra.mxu0 0.0
      %562 = vmatpush.msra.mxu0 0.0
      %563 = vmatpush.msra.mxu0 %v522
      %564 = vmatmul.f32.gmra.mxu0 %v526
      %v565 = vpop.f32.mrf.mxu0
      %v566 = vadd.f32 0.0, %v565
      %567 = vdwg.mxu0
      %v568 = vadd.f32 %v476, %v546
      %v569 = vadd.f32 %v496, %v566
      %570 = vrot.lane.b32.xlu0 %v367, 1
      %v571 = vpop.permute.xlu0 %570
      %572 = vrot.lane.b32.xlu0 %v368, 1
      %v573 = vpop.permute.xlu0 %572
      %574 = vrot.lane.b32.xlu0 %v369, 1
      %v575 = vpop.permute.xlu0 %574
      %vm576 = vcmask 7168
      %v577 = vsel %vm576, %v571, %v573
      %v578 = vsel %vm576, %v573, %v575
      %v581 = vsel %vm380, %v577, 0.0
      %v582 = vsel %vm381, %v578, 0.0
      %s583 = scalar_lea.vmem %s3, 24
      %v584 = vld [vmem:[%s583] sm:$0xff]
      %v586 = vsel %vm288, %v584, 0
      %588 = vmatpush.msra.mxu0 0.0
      %589 = vmatpush.msra.mxu0 0.0
      %590 = vmatpush.msra.mxu0 0.0
      %591 = vmatpush.msra.mxu0 0.0
      %592 = vmatpush.msra.mxu0 0.0
      %593 = vmatpush.msra.mxu0 0.0
      %594 = vmatpush.msra.mxu0 0.0
      %595 = vmatpush.msra.mxu0 0.0
      %596 = vmatpush.msra.mxu0 0.0
      %597 = vmatpush.msra.mxu0 0.0
      %598 = vmatpush.msra.mxu0 0.0
      %599 = vmatpush.msra.mxu0 0.0
      %600 = vmatpush.msra.mxu0 0.0
      %601 = vmatpush.msra.mxu0 0.0
      %602 = vmatpush.msra.mxu0 0.0
      %603 = vmatpush.msra.mxu0 %v581
      %604 = vmatmul.f32.gmra.mxu0 %v586
      %v605 = vpop.f32.mrf.mxu0
      %v606 = vadd.f32 0.0, %v605
      %607 = vdwg.mxu0
      %608 = vmatpush.msra.mxu0 0.0
      %609 = vmatpush.msra.mxu0 0.0
      %610 = vmatpush.msra.mxu0 0.0
      %611 = vmatpush.msra.mxu0 0.0
      %612 = vmatpush.msra.mxu0 0.0
      %613 = vmatpush.msra.mxu0 0.0
      %614 = vmatpush.msra.mxu0 0.0
      %615 = vmatpush.msra.mxu0 0.0
      %616 = vmatpush.msra.mxu0 0.0
      %617 = vmatpush.msra.mxu0 0.0
      %618 = vmatpush.msra.mxu0 0.0
      %619 = vmatpush.msra.mxu0 0.0
      %620 = vmatpush.msra.mxu0 0.0
      %621 = vmatpush.msra.mxu0 0.0
      %622 = vmatpush.msra.mxu0 0.0
      %623 = vmatpush.msra.mxu0 %v582
      %624 = vmatmul.f32.gmra.mxu0 %v586
      %v625 = vpop.f32.mrf.mxu0
      %v626 = vadd.f32 0.0, %v625
      %627 = vdwg.mxu0
      %v628 = vadd.f32 %v568, %v606
      %v629 = vadd.f32 %v569, %v626
      %s630 = scalar_lea.vmem %s3, 32
      %v631 = vld [vmem:[%s630] sm:$0xff]
      %v633 = vsel %vm288, %v631, 0
      %635 = vmatpush.msra.mxu0 0.0
      %636 = vmatpush.msra.mxu0 0.0
      %637 = vmatpush.msra.mxu0 0.0
      %638 = vmatpush.msra.mxu0 0.0
      %639 = vmatpush.msra.mxu0 0.0
      %640 = vmatpush.msra.mxu0 0.0
      %641 = vmatpush.msra.mxu0 0.0
      %642 = vmatpush.msra.mxu0 0.0
      %643 = vmatpush.msra.mxu0 0.0
      %644 = vmatpush.msra.mxu0 0.0
      %645 = vmatpush.msra.mxu0 0.0
      %646 = vmatpush.msra.mxu0 0.0
      %647 = vmatpush.msra.mxu0 0.0
      %648 = vmatpush.msra.mxu0 0.0
      %649 = vmatpush.msra.mxu0 0.0
      %650 = vmatpush.msra.mxu0 %v368
      %651 = vmatmul.f32.gmra.mxu0 %v633
      %v652 = vpop.f32.mrf.mxu0
      %v653 = vadd.f32 0.0, %v652
      %654 = vdwg.mxu0
      %655 = vmatpush.msra.mxu0 0.0
      %656 = vmatpush.msra.mxu0 0.0
      %657 = vmatpush.msra.mxu0 0.0
      %658 = vmatpush.msra.mxu0 0.0
      %659 = vmatpush.msra.mxu0 0.0
      %660 = vmatpush.msra.mxu0 0.0
      %661 = vmatpush.msra.mxu0 0.0
      %662 = vmatpush.msra.mxu0 0.0
      %663 = vmatpush.msra.mxu0 0.0
      %664 = vmatpush.msra.mxu0 0.0
      %665 = vmatpush.msra.mxu0 0.0
      %666 = vmatpush.msra.mxu0 0.0
      %667 = vmatpush.msra.mxu0 0.0
      %668 = vmatpush.msra.mxu0 0.0
      %669 = vmatpush.msra.mxu0 0.0
      %670 = vmatpush.msra.mxu0 %v369
      %671 = vmatmul.f32.gmra.mxu0 %v633
      %v672 = vpop.f32.mrf.mxu0
      %v673 = vadd.f32 0.0, %v672
      %674 = vdwg.mxu0
      %v675 = vadd.f32 %v628, %v653
      %v676 = vadd.f32 %v629, %v673
      %v677 = vld [vmem:[#allocation2 + $0x8] sm:$0xff]
      %v678 = vld [vmem:[#allocation2 + $0x10] sm:$0xff]
      %v679 = vld [vmem:[#allocation2 + $0x18] sm:$0xff]
      %683 = vrot.lane.b32.xlu0 %v677, 127
      %v684 = vpop.permute.xlu0 %683
      %685 = vrot.lane.b32.xlu0 %v678, 127
      %v686 = vpop.permute.xlu0 %685
      %687 = vrot.lane.b32.xlu0 %v679, 127
      %v688 = vpop.permute.xlu0 %687
      %vm689 = vcmask 1039360
      %v690 = vsel %vm689, %v684, %v686
      %v691 = vsel %vm689, %v686, %v688
      %v694 = vsel %vm508, %v690, 0.0
      %v695 = vsel %vm509, %v691, 0.0
      %s696 = scalar_lea.vmem %s3, 40
      %v697 = vld [vmem:[%s696] sm:$0xff]
      %v699 = vsel %vm288, %v697, 0
      %701 = vmatpush.msra.mxu0 0.0
      %702 = vmatpush.msra.mxu0 0.0
      %703 = vmatpush.msra.mxu0 0.0
      %704 = vmatpush.msra.mxu0 0.0
      %705 = vmatpush.msra.mxu0 0.0
      %706 = vmatpush.msra.mxu0 0.0
      %707 = vmatpush.msra.mxu0 0.0
      %708 = vmatpush.msra.mxu0 0.0
      %709 = vmatpush.msra.mxu0 0.0
      %710 = vmatpush.msra.mxu0 0.0
      %711 = vmatpush.msra.mxu0 0.0
      %712 = vmatpush.msra.mxu0 0.0
      %713 = vmatpush.msra.mxu0 0.0
      %714 = vmatpush.msra.mxu0 0.0
      %715 = vmatpush.msra.mxu0 0.0
      %716 = vmatpush.msra.mxu0 %v694
      %717 = vmatmul.f32.gmra.mxu0 %v699
      %v718 = vpop.f32.mrf.mxu0
      %v719 = vadd.f32 0.0, %v718
      %720 = vdwg.mxu0
      %721 = vmatpush.msra.mxu0 0.0
      %722 = vmatpush.msra.mxu0 0.0
      %723 = vmatpush.msra.mxu0 0.0
      %724 = vmatpush.msra.mxu0 0.0
      %725 = vmatpush.msra.mxu0 0.0
      %726 = vmatpush.msra.mxu0 0.0
      %727 = vmatpush.msra.mxu0 0.0
      %728 = vmatpush.msra.mxu0 0.0
      %729 = vmatpush.msra.mxu0 0.0
      %730 = vmatpush.msra.mxu0 0.0
      %731 = vmatpush.msra.mxu0 0.0
      %732 = vmatpush.msra.mxu0 0.0
      %733 = vmatpush.msra.mxu0 0.0
      %734 = vmatpush.msra.mxu0 0.0
      %735 = vmatpush.msra.mxu0 0.0
      %736 = vmatpush.msra.mxu0 %v695
      %737 = vmatmul.f32.gmra.mxu0 %v699
      %v738 = vpop.f32.mrf.mxu0
      %v739 = vadd.f32 0.0, %v738
      %740 = vdwg.mxu0
      %v741 = vadd.f32 %v675, %v719
      %v742 = vadd.f32 %v676, %v739
      %743 = vrot.lane.b32.xlu0 %v677, 113
      %v744 = vpop.permute.xlu0 %743
      %745 = vrot.lane.b32.xlu0 %v678, 113
      %v746 = vpop.permute.xlu0 %745
      %747 = vrot.lane.b32.xlu0 %v679, 113
      %v748 = vpop.permute.xlu0 %747
      %vm749 = vcmask 924672
      %v750 = vsel %vm749, %v744, %v746
      %v751 = vsel %vm749, %v746, %v748
      %v754 = vsel %vm380, %v750, 0.0
      %v755 = vsel %vm381, %v751, 0.0
      %s756 = scalar_lea.vmem %s3, 48
      %v757 = vld [vmem:[%s756] sm:$0xff]
      %v759 = vsel %vm288, %v757, 0
      %761 = vmatpush.msra.mxu0 0.0
      %762 = vmatpush.msra.mxu0 0.0
      %763 = vmatpush.msra.mxu0 0.0
      %764 = vmatpush.msra.mxu0 0.0
      %765 = vmatpush.msra.mxu0 0.0
      %766 = vmatpush.msra.mxu0 0.0
      %767 = vmatpush.msra.mxu0 0.0
      %768 = vmatpush.msra.mxu0 0.0
      %769 = vmatpush.msra.mxu0 0.0
      %770 = vmatpush.msra.mxu0 0.0
      %771 = vmatpush.msra.mxu0 0.0
      %772 = vmatpush.msra.mxu0 0.0
      %773 = vmatpush.msra.mxu0 0.0
      %774 = vmatpush.msra.mxu0 0.0
      %775 = vmatpush.msra.mxu0 0.0
      %776 = vmatpush.msra.mxu0 %v754
      %777 = vmatmul.f32.gmra.mxu0 %v759
      %v778 = vpop.f32.mrf.mxu0
      %v779 = vadd.f32 0.0, %v778
      %780 = vdwg.mxu0
      %781 = vmatpush.msra.mxu0 0.0
      %782 = vmatpush.msra.mxu0 0.0
      %783 = vmatpush.msra.mxu0 0.0
      %784 = vmatpush.msra.mxu0 0.0
      %785 = vmatpush.msra.mxu0 0.0
      %786 = vmatpush.msra.mxu0 0.0
      %787 = vmatpush.msra.mxu0 0.0
      %788 = vmatpush.msra.mxu0 0.0
      %789 = vmatpush.msra.mxu0 0.0
      %790 = vmatpush.msra.mxu0 0.0
      %791 = vmatpush.msra.mxu0 0.0
      %792 = vmatpush.msra.mxu0 0.0
      %793 = vmatpush.msra.mxu0 0.0
      %794 = vmatpush.msra.mxu0 0.0
      %795 = vmatpush.msra.mxu0 0.0
      %796 = vmatpush.msra.mxu0 %v755
      %797 = vmatmul.f32.gmra.mxu0 %v759
      %v798 = vpop.f32.mrf.mxu0
      %v799 = vadd.f32 0.0, %v798
      %800 = vdwg.mxu0
      %v801 = vadd.f32 %v741, %v779
      %v802 = vadd.f32 %v742, %v799
      %s803 = scalar_lea.vmem %s3, 56
      %v804 = vld [vmem:[%s803] sm:$0xff]
      %805 = vrot.lane.b32.xlu0 %v677, 112
      %v806 = vpop.permute.xlu0 %805
      %807 = vrot.lane.b32.xlu0 %v678, 112
      %v808 = vpop.permute.xlu0 %807
      %809 = vrot.lane.b32.xlu0 %v679, 112
      %v810 = vpop.permute.xlu0 %809
      %vm811 = vcmask 916480
      %v812 = vsel %vm811, %v806, %v808
      %v813 = vsel %vm811, %v808, %v810
      %v817 = vsel %vm288, %v804, 0
      %819 = vmatpush.msra.mxu0 0.0
      %820 = vmatpush.msra.mxu0 0.0
      %821 = vmatpush.msra.mxu0 0.0
      %822 = vmatpush.msra.mxu0 0.0
      %823 = vmatpush.msra.mxu0 0.0
      %824 = vmatpush.msra.mxu0 0.0
      %825 = vmatpush.msra.mxu0 0.0
      %826 = vmatpush.msra.mxu0 0.0
      %827 = vmatpush.msra.mxu0 0.0
      %828 = vmatpush.msra.mxu0 0.0
      %829 = vmatpush.msra.mxu0 0.0
      %830 = vmatpush.msra.mxu0 0.0
      %831 = vmatpush.msra.mxu0 0.0
      %832 = vmatpush.msra.mxu0 0.0
      %833 = vmatpush.msra.mxu0 0.0
      %834 = vmatpush.msra.mxu0 %v812
      %835 = vmatmul.f32.gmra.mxu0 %v817
      %v836 = vpop.f32.mrf.mxu0
      %v837 = vadd.f32 0.0, %v836
      %838 = vdwg.mxu0
      %839 = vmatpush.msra.mxu0 0.0
      %840 = vmatpush.msra.mxu0 0.0
      %841 = vmatpush.msra.mxu0 0.0
      %842 = vmatpush.msra.mxu0 0.0
      %843 = vmatpush.msra.mxu0 0.0
      %844 = vmatpush.msra.mxu0 0.0
      %845 = vmatpush.msra.mxu0 0.0
      %846 = vmatpush.msra.mxu0 0.0
      %847 = vmatpush.msra.mxu0 0.0
      %848 = vmatpush.msra.mxu0 0.0
      %849 = vmatpush.msra.mxu0 0.0
      %850 = vmatpush.msra.mxu0 0.0
      %851 = vmatpush.msra.mxu0 0.0
      %852 = vmatpush.msra.mxu0 0.0
      %853 = vmatpush.msra.mxu0 0.0
      %854 = vmatpush.msra.mxu0 %v813
      %855 = vmatmul.f32.gmra.mxu0 %v817
      %v856 = vpop.f32.mrf.mxu0
      %v857 = vadd.f32 0.0, %v856
      %858 = vdwg.mxu0
      %v859 = vadd.f32 %v801, %v837
      %v860 = vadd.f32 %v802, %v857
      %861 = vrot.lane.b32.xlu0 %v677, 111
      %v862 = vpop.permute.xlu0 %861
      %863 = vrot.lane.b32.xlu0 %v678, 111
      %v864 = vpop.permute.xlu0 %863
      %865 = vrot.lane.b32.xlu0 %v679, 111
      %v866 = vpop.permute.xlu0 %865
      %vm867 = vcmask 908288
      %v868 = vsel %vm867, %v862, %v864
      %v869 = vsel %vm867, %v864, %v866
      %v872 = vsel %vm508, %v868, 0.0
      %v873 = vsel %vm509, %v869, 0.0
      %s874 = scalar_lea.vmem %s3, 64
      %v875 = vld [vmem:[%s874] sm:$0xff]
      %v877 = vsel %vm288, %v875, 0
      %879 = vmatpush.msra.mxu0 0.0
      %880 = vmatpush.msra.mxu0 0.0
      %881 = vmatpush.msra.mxu0 0.0
      %882 = vmatpush.msra.mxu0 0.0
      %883 = vmatpush.msra.mxu0 0.0
      %884 = vmatpush.msra.mxu0 0.0
      %885 = vmatpush.msra.mxu0 0.0
      %886 = vmatpush.msra.mxu0 0.0
      %887 = vmatpush.msra.mxu0 0.0
      %888 = vmatpush.msra.mxu0 0.0
      %889 = vmatpush.msra.mxu0 0.0
      %890 = vmatpush.msra.mxu0 0.0
      %891 = vmatpush.msra.mxu0 0.0
      %892 = vmatpush.msra.mxu0 0.0
      %893 = vmatpush.msra.mxu0 0.0
      %894 = vmatpush.msra.mxu0 %v872
      %895 = vmatmul.f32.gmra.mxu0 %v877
      %v896 = vpop.f32.mrf.mxu0
      %v897 = vadd.f32 0.0, %v896
      %898 = vdwg.mxu0
      %899 = vmatpush.msra.mxu0 0.0
      %900 = vmatpush.msra.mxu0 0.0
      %901 = vmatpush.msra.mxu0 0.0
      %902 = vmatpush.msra.mxu0 0.0
      %903 = vmatpush.msra.mxu0 0.0
      %904 = vmatpush.msra.mxu0 0.0
      %905 = vmatpush.msra.mxu0 0.0
      %906 = vmatpush.msra.mxu0 0.0
      %907 = vmatpush.msra.mxu0 0.0
      %908 = vmatpush.msra.mxu0 0.0
      %909 = vmatpush.msra.mxu0 0.0
      %910 = vmatpush.msra.mxu0 0.0
      %911 = vmatpush.msra.mxu0 0.0
      %912 = vmatpush.msra.mxu0 0.0
      %913 = vmatpush.msra.mxu0 0.0
      %914 = vmatpush.msra.mxu0 %v873
      %915 = vmatmul.f32.gmra.mxu0 %v877
      %v916 = vpop.f32.mrf.mxu0
      %v917 = vadd.f32 0.0, %v916
      %918 = vdwg.mxu0
      %v919 = vadd.f32 %v859, %v897
      %v920 = vadd.f32 %v860, %v917
      %v921 = vld [vmem:[%s4] sm:$0xff]
      %923 = vset.pattern.permute.xlu0 0
      %924 = vperm.xlu0 %923, %v921
      %v925 = vpop.permute.xlu0 %924
      %v927 = vadd.f32 %v919, %v925
      %v928 = vadd.f32 %v920, %v925
      %v929 = vmax.f32 %v927, 0.0
      %v930 = vmax.f32 %v928, 0.0
      %v931 = vld [vmem:[%s5] sm:$0xff]
      %v932 = vld [vmem:[%s6] sm:$0xff]
      %934 = vset.pattern.permute.xlu0 0
      %935 = vperm.xlu0 %934, %v932
      %v936 = vpop.permute.xlu0 %935
      %v939 = vsel %vm288, %v931, 0
      %941 = vmatpush.msra.mxu0 0.0
      %942 = vmatpush.msra.mxu0 0.0
      %943 = vmatpush.msra.mxu0 0.0
      %944 = vmatpush.msra.mxu0 0.0
      %945 = vmatpush.msra.mxu0 0.0
      %946 = vmatpush.msra.mxu0 0.0
      %947 = vmatpush.msra.mxu0 0.0
      %948 = vmatpush.msra.mxu0 0.0
      %949 = vmatpush.msra.mxu0 0.0
      %950 = vmatpush.msra.mxu0 0.0
      %951 = vmatpush.msra.mxu0 0.0
      %952 = vmatpush.msra.mxu0 0.0
      %953 = vmatpush.msra.mxu0 0.0
      %954 = vmatpush.msra.mxu0 0.0
      %955 = vmatpush.msra.mxu0 0.0
      %956 = vmatpush.msra.mxu0 %v929
      %957 = vmatmul.f32.gmra.mxu0 %v939
      %v958 = vpop.f32.mrf.mxu0
      %v959 = vadd.f32 %v936, %v958
      %960 = vdwg.mxu0
      %961 = vmatpush.msra.mxu0 0.0
      %962 = vmatpush.msra.mxu0 0.0
      %963 = vmatpush.msra.mxu0 0.0
      %964 = vmatpush.msra.mxu0 0.0
      %965 = vmatpush.msra.mxu0 0.0
      %966 = vmatpush.msra.mxu0 0.0
      %967 = vmatpush.msra.mxu0 0.0
      %968 = vmatpush.msra.mxu0 0.0
      %969 = vmatpush.msra.mxu0 0.0
      %970 = vmatpush.msra.mxu0 0.0
      %971 = vmatpush.msra.mxu0 0.0
      %972 = vmatpush.msra.mxu0 0.0
      %973 = vmatpush.msra.mxu0 0.0
      %974 = vmatpush.msra.mxu0 0.0
      %975 = vmatpush.msra.mxu0 0.0
      %976 = vmatpush.msra.mxu0 %v930
      %977 = vmatmul.f32.gmra.mxu0 %v939
      %v978 = vpop.f32.mrf.mxu0
      %v979 = vadd.f32 %v936, %v978
      %980 = vdwg.mxu0
      %v981 = vadd.f32 %v959, %v279
      %v982 = vadd.f32 %v979, %v280
      %983 = vst [vmem:[%s278] sm:$0xff] %v981
      %984 = vst [vmem:[%s278 + $0x8] sm:$0xff] %v982
      %p985 = scmp.lt.s32.totalorder %s18, 1
      %s986 = scalar_select %p985, %s18, 1
      %s987 = smul.addr %s986, 2
      %s988 = smul.addr %s987, 8
      %s989 = scalar_lea.vmem %s7, %s988
      // Predicated region
      $region49: #{res_bottleneck_forward.1} parent=47 // pred_check
        %p990 = pneg %p188
      $region50: #{res_bottleneck_forward.1} parent=47 // pred_check_branch
        %992 = sbr.rel (%p990) target = $region52
      $region51: #{res_bottleneck_forward.1} parent=47 // pred_region
        _
      $region52: #{res_bottleneck_forward.1} parent=47 // pred_fallthru
        _
    $region48: #{res_bottleneck_forward.1} parent=5 // pred_fallthru
      _
    %p993 = scmp.le.s32.totalorder 2, %s13
    // Predicated region
    $region53: #{res_bottleneck_forward.1} parent=5 // pred_check
      %p994 = pneg %p993
    $region54: #{res_bottleneck_forward.1} parent=5 // pred_check_branch
      %996 = sbr.rel (%p994) target = $region56
    $region55: #{res_bottleneck_forward.1} parent=5 // pred_region
      %s997 = ssub.s32 %s13, 2
      // Predicated region
      $region57: #{res_bottleneck_forward.1} parent=55 // pred_check
        %p998 = pneg %p194
      $region58: #{res_bottleneck_forward.1} parent=55 // pred_check_branch
        %1000 = sbr.rel (%p998) target = $region60
      $region59: #{res_bottleneck_forward.1} parent=55 // pred_region
        %p1001 = scmp.lt.s32.totalorder %s19, 1
        %s1002 = scalar_select %p1001, %s19, 1
        %s1003 = smul.addr %s1002, 2
        %s1004 = smul.addr %s1003, 8
        %s1005 = scalar_lea.vmem %s7, %s1004
      $region60: #{res_bottleneck_forward.1} parent=55 // pred_fallthru
        _
    $region56: #{res_bottleneck_forward.1} parent=5 // pred_fallthru
      _
  $region6: #{res_bottleneck_forward.1} parent=0 // loop_footer
    %s17 = sadd.s32 1, %s13
  $region7: #{res_bottleneck_forward.1} parent=0 // loop_footer_branch
    %12 = sbr.rel target = $region3
  $region8: #{res_bottleneck_forward.1} parent=0 // loop_exit
    _

</llo_original>
